<compile_context>
chip_gen: v7x
topology: tpu7x:2x2x1
jax: 0.10.0
libtpu: 0.0.40
codegen_flags: <defaults>
</compile_context>

<pallas_src>
import functools

import jax
import jax.numpy as jnp
from jax import lax
from jax.experimental import pallas as pl
from jax.experimental.pallas import tpu as pltpu


# lane assignment inside the packed (1, 128) f32 output
_LANE_LABEL = 0
_LANE_CLASS_ERROR = 1
_LANE_SPAN = 2
_LANE_GIOU = 3
_LANE_SALIENCY = 4
_LANE_CONTRASTIVE = 5


# ---------------------------------------------------------------------------
# Fused Pallas kernel
# ---------------------------------------------------------------------------
def _fused_losses_kernel(*refs, eos_coef, temperature, margin,
                         with_labels, with_spans, with_contrastive, with_saliency):
    refs = list(refs)
    out_ref = refs.pop()                        # (1, 128) f32
    bidx_ref = refs.pop(0)                      # (Nm,) int32  SMEM  matched batch idx
    sidx_ref = refs.pop(0)                      # (Nm,) int32  SMEM  matched query idx
    logits_ref = refs.pop(0) if with_labels else None          # (B, 2, Q)
    if with_spans:
        srcsp_ref = refs.pop(0)                 # (2, Nm)  rows = (cx, w)
        tgtsp_ref = refs.pop(0)                 # (2, Nm)
    if with_contrastive:
        q_ref = refs.pop(0)                     # (B, D, M)
        t_ref = refs.pop(0)                     # (B, D, N)
    if with_saliency:
        sal_ref = refs.pop(0)                   # (B, L)
        pos_ref = refs.pop(0)                   # (B, P) int32
        neg_ref = refs.pop(0)                   # (B, P) int32

    n_match = bidx_ref.shape[0]
    lane = lax.broadcasted_iota(jnp.int32, (1, 128), 1)
    packed = jnp.zeros((1, 128), jnp.float32)

    # ---- matched-query indicator (foreground mask == contrastive positive map)
    # built in-kernel from the SMEM index lists; layout (B, 1, Q), Q on lanes.
    fg = None
    if with_labels or with_contrastive:
        if with_labels:
            B = logits_ref.shape[0]
            Q = logits_ref.shape[2]
        else:
            B = q_ref.shape[0]
            Q = q_ref.shape[2]
        b_iota = lax.broadcasted_iota(jnp.int32, (B, 1, Q), 0)
        q_iota = lax.broadcasted_iota(jnp.int32, (B, 1, Q), 2)
        fg = jnp.zeros((B, 1, Q), jnp.float32)
        for i in range(n_match):                               # Nm is static & small
            hit = (b_iota == bidx_ref[i]) & (q_iota == sidx_ref[i])
            fg = jnp.where(hit, 1.0, fg)

    # ---- weighted 2-class cross entropy (foreground = class 0) + class_error
    if with_labels:
        lg = logits_ref[...].astype(jnp.float32)               # (B, 2, Q)
        x0 = lg[:, 0:1, :]                                     # (B, 1, Q) foreground logit
        x1 = lg[:, 1:2, :]                                     # (B, 1, Q) background logit
        m = jnp.maximum(x0, x1)
        lse = m + jnp.log(jnp.exp(x0 - m) + jnp.exp(x1 - m))
        x_y = fg * x0 + (1.0 - fg) * x1
        w_y = fg * 1.0 + (1.0 - fg) * eos_coef
        # F.cross_entropy(weight, reduction='none').mean() divides by B*Q.
        loss_label = jnp.sum(w_y * (lse - x_y)) / float(lg.shape[0] * lg.shape[2])
        correct = jnp.sum(fg * (x0 >= x1).astype(jnp.float32))
        class_error = 100.0 - 100.0 * correct / float(n_match)
        packed = packed + jnp.where(lane == _LANE_LABEL, loss_label, 0.0)
        packed = packed + jnp.where(lane == _LANE_CLASS_ERROR, class_error, 0.0)

    # ---- span L1 + (1 - diag GIoU) on matched (cx, w) pairs, lane-dense (2, Nm)
    if with_spans:
        ssp = srcsp_ref[...].astype(jnp.float32)
        tsp = tgtsp_ref[...].astype(jnp.float32)
        s_cx, s_w = ssp[0:1, :], ssp[1:2, :]
        t_cx, t_w = tsp[0:1, :], tsp[1:2, :]
        loss_l1 = jnp.sum(jnp.abs(ssp - tsp)) / float(2 * n_match)
        s1 = s_cx - 0.5 * s_w
        e1 = s_cx + 0.5 * s_w
        s2 = t_cx - 0.5 * t_w
        e2 = t_cx + 0.5 * t_w
        inter = jnp.maximum(jnp.minimum(e1, e2) - jnp.maximum(s1, s2), 0.0)
        union = (e1 - s1) + (e2 - s2) - inter
        iou = inter / union
        enc = jnp.maximum(jnp.maximum(e1, e2) - jnp.minimum(s1, s2), 0.0)
        giou = iou - (enc - union) / enc
        loss_giou = jnp.sum(1.0 - giou) / float(n_match)
        packed = packed + jnp.where(lane == _LANE_SPAN, loss_l1, 0.0)
        packed = packed + jnp.where(lane == _LANE_GIOU, loss_giou, 0.0)

    # ---- saliency hinge: in-kernel index selection via iota compare (no XLA gather)
    if with_saliency:
        sal = sal_ref[...].astype(jnp.float32)                 # (B, L)
        Bs, L = sal.shape
        pos_idx = pos_ref[...]                                 # (B, P) int32
        neg_idx = neg_ref[...]
        P = pos_idx.shape[1]
        l_iota = lax.broadcasted_iota(jnp.int32, (Bs, L), 1)
        hinge_total = 0.0
        for p in range(P):                                     # P is static & small
            pos_s = jnp.sum(jnp.where(l_iota == pos_idx[:, p:p + 1], sal, 0.0),
                            axis=1, keepdims=True)             # (B, 1)
            neg_s = jnp.sum(jnp.where(l_iota == neg_idx[:, p:p + 1], sal, 0.0),
                            axis=1, keepdims=True)
            hinge_total = hinge_total + jnp.sum(jnp.maximum(margin + neg_s - pos_s, 0.0))
        loss_sal = hinge_total / float(Bs * P) * 2.0
        packed = packed + jnp.where(lane == _LANE_SALIENCY, loss_sal, 0.0)

    # ---- contrastive align: fold the text-token sum into the contraction
    #      s[b, m] = (sum_n t[b, :, n]) . q[b, :, m] / temperature  (VPU + reduces only)
    if with_contrastive:
        q = q_ref[...].astype(jnp.float32)                     # (B, D, M)
        t = t_ref[...].astype(jnp.float32)                     # (B, D, N)
        t_sum = jnp.sum(t, axis=2, keepdims=True)              # (B, D, 1)
        s = jnp.sum(q * t_sum, axis=1, keepdims=True) / temperature   # (B, 1, M)
        pos_term = jnp.sum(s * fg, axis=2, keepdims=True)      # (B, 1, 1)
        num_pos = jnp.sum(fg, axis=2, keepdims=True)           # (B, 1, 1)
        smax = jnp.max(s, axis=2, keepdims=True)
        neg_term = smax + jnp.log(jnp.sum(jnp.exp(s - smax), axis=2, keepdims=True))
        loss_con = jnp.sum(neg_term - pos_term / num_pos) / float(q.shape[0])
        packed = packed + jnp.where(lane == _LANE_CONTRASTIVE, loss_con, 0.0)

    out_ref[...] = packed                                       # single lane-dense store


# ---------------------------------------------------------------------------
# SetCriterion forward (glue + one fused Pallas kernel per decoder layer)
# ---------------------------------------------------------------------------
class SetCriterionPallas:
    def __init__(self, matcher, weight_dict, eos_coef, losses, temperature,
                 span_loss_type, max_v_l, saliency_margin=1.0):
        self.matcher = matcher
        self.weight_dict = weight_dict
        self.losses = losses
        self.temperature = float(temperature)
        self.span_loss_type = span_loss_type
        self.max_v_l = max_v_l
        self.saliency_margin = float(saliency_margin)
        self.foreground_label = 0
        self.background_label = 1
        self.eos_coef = float(eos_coef)
        # deterministic buffer: torch.ones(2); empty_weight[-1] = eos_coef
        self.empty_weight = jnp.array([1.0, float(eos_coef)], dtype=jnp.float32)
        supported = {'spans', 'labels', 'saliency', 'contrastive_align'}
        assert set(losses) <= supported, f'unsupported losses: {set(losses) - supported}'

    # --- permutation helper (glue) ---
    def _get_src_permutation_idx(self, indices):
        batch_idx = jnp.concatenate(
            [jnp.full_like(src, i) for i, (src, _) in enumerate(indices)])
        src_idx = jnp.concatenate([src for src, _ in indices])
        return batch_idx.astype(jnp.int32), src_idx.astype(jnp.int32)

    # --- single fused kernel call computing every requested loss ---
    def _compute_losses(self, outputs, targets, indices, include_saliency):
        batch_idx, src_idx = self._get_src_permutation_idx(indices)

        with_labels = 'labels' in self.losses
        with_spans = 'spans' in self.losses
        with_contrastive = 'contrastive_align' in self.losses
        saliency_requested = include_saliency and ('saliency' in self.losses)
        with_saliency = saliency_requested and ('saliency_pos_labels' in targets)

        smem = pl.BlockSpec(memory_space=pltpu.MemorySpace.SMEM)
        vmem = pl.BlockSpec(memory_space=pltpu.MemorySpace.VMEM)
        kernel_inputs = [batch_idx, src_idx]
        in_specs = [smem, smem]

        if with_labels:
            # (B, Q, 2) -> (B, 2, Q): class axis off the lanes, Q lane-dense
            kernel_inputs.append(jnp.swapaxes(outputs['pred_logits'], 1, 2))
            in_specs.append(vmem)
        if with_spans:
            if self.span_loss_type != 'l1':
                # TODO(synk): 'ce' span loss (cross-entropy over max_v_l bins) not implemented.
                raise NotImplementedError("span_loss_type='ce' not supported in this kernel")
            src_spans = outputs['pred_spans'][batch_idx, src_idx]        # (Nm, 2) glue gather
            tgt_spans = jnp.concatenate(
                [t['spans'][i] for t, (_, i) in zip(targets['span_labels'], indices)], axis=0)
            kernel_inputs.append(src_spans.T)                            # (2, Nm) lane-dense
            kernel_inputs.append(tgt_spans.T)
            in_specs += [vmem, vmem]
        if with_contrastive:
            kernel_inputs.append(jnp.swapaxes(outputs['proj_queries'], 1, 2))   # (B, D, M)
            kernel_inputs.append(jnp.swapaxes(outputs['proj_txt_mem'], 1, 2))   # (B, D, N)
            in_specs += [vmem, vmem]
        if with_saliency:
            kernel_inputs.append(outputs['saliency_scores'])             # (B, L)
            kernel_inputs.append(targets['saliency_pos_labels'].astype(jnp.int32))
            kernel_inputs.append(targets['saliency_neg_labels'].astype(jnp.int32))
            in_specs += [vmem, vmem, vmem]

        kernel = functools.partial(
            _fused_losses_kernel,
            eos_coef=self.eos_coef, temperature=self.temperature,
            margin=self.saliency_margin,
            with_labels=with_labels, with_spans=with_spans,
            with_contrastive=with_contrastive, with_saliency=with_saliency)

        packed = pl.pallas_call(
            kernel,
            out_shape=jax.ShapeDtypeStruct((1, 128), jnp.float32),
            in_specs=in_specs,
            out_specs=pl.BlockSpec(memory_space=pltpu.MemorySpace.VMEM),
            # whole-array (ungridded) VMEM residency; explicit budget so scaling
            # to production shapes on v7x (64 MiB physical) fails loudly, not silently.
            compiler_params=pltpu.CompilerParams(vmem_limit_bytes=32 * 1024 * 1024),
        )(*kernel_inputs)[0]

        losses = {}
        if with_labels:
            losses['loss_label'] = packed[_LANE_LABEL]
            losses['class_error'] = packed[_LANE_CLASS_ERROR]
        if with_spans:
            losses['loss_span'] = packed[_LANE_SPAN]
            losses['loss_giou'] = packed[_LANE_GIOU]
        if with_saliency:
            losses['loss_saliency'] = packed[_LANE_SALIENCY]
        elif saliency_requested:
            # TODO(synk): original returns a Python int 0 when saliency labels are absent.
            losses['loss_saliency'] = 0
        if with_contrastive:
            losses['loss_contrastive_align'] = packed[_LANE_CONTRASTIVE]
        return losses

    def forward(self, outputs, targets):
        outputs_without_aux = {k: v for k, v in outputs.items() if k != 'aux_outputs'}
        # TODO(synk): the Hungarian matcher (scipy linear_sum_assignment) has no clean
        # Pallas equivalent; it stays an external callable.
        indices = self.matcher(outputs_without_aux, targets)
        losses = {}
        losses.update(self._compute_losses(outputs, targets, indices, include_saliency=True))
        if 'aux_outputs' in outputs:
            for i, aux_outputs in enumerate(outputs['aux_outputs']):
                indices = self.matcher(aux_outputs, targets)
                l_dict = self._compute_losses(aux_outputs, targets, indices,
                                              include_saliency=False)
                losses.update({k + f'_{i}': v for k, v in l_dict.items()})
        return losses

    __call__ = forward


# ---------------------------------------------------------------------------
# Pure-JAX reference for verification
# ---------------------------------------------------------------------------
def ref_losses(outputs, targets, indices, empty_weight, temperature, saliency_margin):
    B, Q, _ = outputs['pred_logits'].shape
    batch_idx = jnp.concatenate([jnp.full_like(s, i) for i, (s, _) in enumerate(indices)])
    src_idx = jnp.concatenate([s for s, _ in indices])
    # spans
    src_spans = outputs['pred_spans'][batch_idx, src_idx]
    tgt_spans = jnp.concatenate(
        [t['spans'][j] for t, (_, j) in zip(targets['span_labels'], indices)], 0)
    loss_span = jnp.mean(jnp.abs(src_spans - tgt_spans))

    def cxw_to_xx(x):
        return jnp.stack([x[:, 0] - 0.5 * x[:, 1], x[:, 0] + 0.5 * x[:, 1]], -1)

    a = cxw_to_xx(src_spans)
    b = cxw_to_xx(tgt_spans)
    inter = jnp.maximum(jnp.minimum(a[:, 1], b[:, 1]) - jnp.maximum(a[:, 0], b[:, 0]), 0.0)
    union = (a[:, 1] - a[:, 0]) + (b[:, 1] - b[:, 0]) - inter
    iou = inter / union
    enc = jnp.maximum(jnp.maximum(a[:, 1], b[:, 1]) - jnp.minimum(a[:, 0], b[:, 0]), 0.0)
    giou = iou - (enc - union) / enc
    loss_giou = jnp.mean(1.0 - giou)
    # labels
    logits = outputs['pred_logits']
    tc = jnp.ones((B, Q), jnp.int32).at[batch_idx, src_idx].set(0)
    logp = jax.nn.log_softmax(logits, -1)
    nll = -jnp.take_along_axis(logp, tc[..., None], -1)[..., 0]
    loss_label = jnp.mean(empty_weight[tc] * nll)
    matched = logits[batch_idx, src_idx]
    pred = jnp.argmax(matched, axis=-1)
    class_error = 100.0 - jnp.mean((pred == 0).astype(jnp.float32)) * 100.0
    # saliency
    sal = outputs['saliency_scores']
    pi = targets['saliency_pos_labels']
    ni = targets['saliency_neg_labels']
    bar = jnp.arange(B)[:, None]
    pos_s = sal[bar, pi]
    neg_s = sal[bar, ni]
    loss_sal = jnp.sum(jnp.maximum(saliency_margin + neg_s - pos_s, 0.0)) / (B * pi.shape[1]) * 2.0
    # contrastive
    qm = outputs['proj_queries']
    tm = outputs['proj_txt_mem']
    lg = jnp.einsum('bmd,bnd->bmn', qm, tm)
    s = jnp.sum(lg, 2) / temperature
    pm = jnp.zeros((B, Q), jnp.float32).at[batch_idx, src_idx].set(1.0)
    pos_term = jnp.sum(s * pm, 1)
    num_pos = jnp.sum(pm, 1)
    neg_term = jax.nn.logsumexp(s, 1)
    loss_con = jnp.mean(-pos_term / num_pos + neg_term)
    return {'loss_span': loss_span, 'loss_giou': loss_giou, 'loss_label': loss_label,
            'class_error': class_error, 'loss_saliency': loss_sal,
            'loss_contrastive_align': loss_con}


# ---------------------------------------------------------------------------
# Main
# ---------------------------------------------------------------------------
if __name__ == "__main__":
    key = jax.random.PRNGKey(0)
    B, Q, D, NT, L, P, NTGT = 2, 8, 32, 8, 16, 2, 2
    ks = jax.random.split(key, 8)

    def l2norm(x):
        return x / jnp.linalg.norm(x, axis=-1, keepdims=True)

    pred_logits = jax.random.normal(ks[0], (B, Q, 2), jnp.float32)
    pred_spans = jax.nn.sigmoid(jax.random.normal(ks[1], (B, Q, 2), jnp.float32))  # (cx, w)
    saliency_scores = jax.random.normal(ks[2], (B, L), jnp.float32)
    proj_queries = l2norm(jax.random.normal(ks[3], (B, Q, D), jnp.float32))
    proj_txt_mem = l2norm(jax.random.normal(ks[4], (B, NT, D), jnp.float32))
    tgt_spans_0 = jax.nn.sigmoid(jax.random.normal(ks[5], (NTGT, 2), jnp.float32))
    tgt_spans_1 = jax.nn.sigmoid(jax.random.normal(ks[6], (NTGT, 2), jnp.float32))

    outputs = {
        'pred_logits': pred_logits,
        'pred_spans': pred_spans,
        'saliency_scores': saliency_scores,
        'proj_queries': proj_queries,
        'proj_txt_mem': proj_txt_mem,
    }
    targets = {
        'span_labels': [{'spans': tgt_spans_0}, {'spans': tgt_spans_1}],
        'saliency_pos_labels': jnp.array([[0, 3], [2, 5]], jnp.int32),
        'saliency_neg_labels': jnp.array([[8, 10], [9, 12]], jnp.int32),
    }

    # TODO(synk): the Hungarian matcher (scipy.optimize.linear_sum_assignment) has no clean
    # Pallas equivalent; use a fixed deterministic matching for this synthetic test.
    def fixed_matcher(outputs_, targets_):
        return [(jnp.array([0, 1], jnp.int32), jnp.array([0, 1], jnp.int32)),
                (jnp.array([2, 3], jnp.int32), jnp.array([0, 1], jnp.int32))]

    criterion = SetCriterionPallas(
        matcher=fixed_matcher,
        weight_dict={'loss_span': 10, 'loss_giou': 1, 'loss_label': 4,
                     'loss_saliency': 1, 'loss_contrastive_align': 0.02},
        eos_coef=0.1,
        losses=['spans', 'labels', 'saliency', 'contrastive_align'],
        temperature=0.07,
        span_loss_type='l1',
        max_v_l=75,
        saliency_margin=1.0,
    )

    losses = criterion(outputs, targets)
    losses = jax.block_until_ready(losses)

    # verify against pure-JAX reference
    indices = fixed_matcher(outputs, targets)
    ref = ref_losses(outputs, targets, indices, criterion.empty_weight,
                     criterion.temperature, criterion.saliency_margin)
    for k, v in ref.items():
        got = losses[k]
        assert jnp.allclose(got, v, rtol=5e-3, atol=5e-3), (k, float(got), float(v))

    print("KERNEL_OK")
</pallas_src>

<mosaic_0001>
module attributes {stable_mosaic.version = 11 : i64} {
  func.func @_fused_losses_kernel(%arg0: memref<4xi32, #tpu.memory_space<smem>>, %arg1: memref<4xi32, #tpu.memory_space<smem>>, %arg2: memref<2x2x8xf32, #tpu.memory_space<vmem>>, %arg3: memref<2x4xf32, #tpu.memory_space<vmem>>, %arg4: memref<2x4xf32, #tpu.memory_space<vmem>>, %arg5: memref<2x32x8xf32, #tpu.memory_space<vmem>>, %arg6: memref<2x32x8xf32, #tpu.memory_space<vmem>>, %arg7: memref<2x16xf32, #tpu.memory_space<vmem>>, %arg8: memref<2x2xi32, #tpu.memory_space<vmem>>, %arg9: memref<2x2xi32, #tpu.memory_space<vmem>>, %arg10: memref<1x128xf32, #tpu.memory_space<vmem>>) attributes {dimension_semantics = [], scalar_prefetch = 0 : i64, scratch_operands = 0 : i64, tpu.core_type = #tpu.core_type<tc>} {
    %0 = tpu.iota {dimensions = array<i32: 1>} : vector<1x128xi32>
    %cst = arith.constant 0.000000e+00 : f32
    %1 = vector.broadcast %cst : f32 to vector<1x128xf32>
    %2 = tpu.iota {dimensions = array<i32: 0>} : vector<2x1x8xi32>
    %3 = tpu.iota {dimensions = array<i32: 2>} : vector<2x1x8xi32>
    %cst_0 = arith.constant 0.000000e+00 : f32
    %4 = vector.broadcast %cst_0 : f32 to vector<2x1x8xf32>
    %c0 = arith.constant 0 : index
    %5 = memref.load %arg0[%c0] : memref<4xi32, #tpu.memory_space<smem>>
    %6 = vector.broadcast %5 : i32 to vector<2x1x8xi32>
    %7 = arith.cmpi eq, %2, %6 : vector<2x1x8xi32>
    %c0_1 = arith.constant 0 : index
    %8 = memref.load %arg1[%c0_1] : memref<4xi32, #tpu.memory_space<smem>>
    %9 = vector.broadcast %8 : i32 to vector<2x1x8xi32>
    %10 = arith.cmpi eq, %3, %9 : vector<2x1x8xi32>
    %11 = arith.andi %7, %10 : vector<2x1x8xi1>
    %cst_2 = arith.constant 1.000000e+00 : f32
    %12 = vector.broadcast %cst_2 : f32 to vector<2x1x8xf32>
    %13 = arith.select %11, %12, %4 : vector<2x1x8xi1>, vector<2x1x8xf32>
    %c1 = arith.constant 1 : index
    %14 = memref.load %arg0[%c1] : memref<4xi32, #tpu.memory_space<smem>>
    %15 = vector.broadcast %14 : i32 to vector<2x1x8xi32>
    %16 = arith.cmpi eq, %2, %15 : vector<2x1x8xi32>
    %c1_3 = arith.constant 1 : index
    %17 = memref.load %arg1[%c1_3] : memref<4xi32, #tpu.memory_space<smem>>
    %18 = vector.broadcast %17 : i32 to vector<2x1x8xi32>
    %19 = arith.cmpi eq, %3, %18 : vector<2x1x8xi32>
    %20 = arith.andi %16, %19 : vector<2x1x8xi1>
    %cst_4 = arith.constant 1.000000e+00 : f32
    %21 = vector.broadcast %cst_4 : f32 to vector<2x1x8xf32>
    %22 = arith.select %20, %21, %13 : vector<2x1x8xi1>, vector<2x1x8xf32>
    %c2 = arith.constant 2 : index
    %23 = memref.load %arg0[%c2] : memref<4xi32, #tpu.memory_space<smem>>
    %24 = vector.broadcast %23 : i32 to vector<2x1x8xi32>
    %25 = arith.cmpi eq, %2, %24 : vector<2x1x8xi32>
    %c2_5 = arith.constant 2 : index
    %26 = memref.load %arg1[%c2_5] : memref<4xi32, #tpu.memory_space<smem>>
    %27 = vector.broadcast %26 : i32 to vector<2x1x8xi32>
    %28 = arith.cmpi eq, %3, %27 : vector<2x1x8xi32>
    %29 = arith.andi %25, %28 : vector<2x1x8xi1>
    %cst_6 = arith.constant 1.000000e+00 : f32
    %30 = vector.broadcast %cst_6 : f32 to vector<2x1x8xf32>
    %31 = arith.select %29, %30, %22 : vector<2x1x8xi1>, vector<2x1x8xf32>
    %c3 = arith.constant 3 : index
    %32 = memref.load %arg0[%c3] : memref<4xi32, #tpu.memory_space<smem>>
    %33 = vector.broadcast %32 : i32 to vector<2x1x8xi32>
    %34 = arith.cmpi eq, %2, %33 : vector<2x1x8xi32>
    %c3_7 = arith.constant 3 : index
    %35 = memref.load %arg1[%c3_7] : memref<4xi32, #tpu.memory_space<smem>>
    %36 = vector.broadcast %35 : i32 to vector<2x1x8xi32>
    %37 = arith.cmpi eq, %3, %36 : vector<2x1x8xi32>
    %38 = arith.andi %34, %37 : vector<2x1x8xi1>
    %cst_8 = arith.constant 1.000000e+00 : f32
    %39 = vector.broadcast %cst_8 : f32 to vector<2x1x8xf32>
    %40 = arith.select %38, %39, %31 : vector<2x1x8xi1>, vector<2x1x8xf32>
    %c0_9 = arith.constant 0 : index
    %c0_10 = arith.constant 0 : index
    %c0_11 = arith.constant 0 : index
    %41 = vector.load %arg2[%c0_9, %c0_10, %c0_11] : memref<2x2x8xf32, #tpu.memory_space<vmem>>, vector<2x2x8xf32>
    %42 = vector.extract_strided_slice %41 {offsets = [0, 0, 0], sizes = [2, 1, 8], strides = [1, 1, 1]} : vector<2x2x8xf32> to vector<2x1x8xf32>
    %43 = vector.extract_strided_slice %41 {offsets = [0, 1, 0], sizes = [2, 1, 8], strides = [1, 1, 1]} : vector<2x2x8xf32> to vector<2x1x8xf32>
    %44 = arith.maximumf %42, %43 : vector<2x1x8xf32>
    %45 = arith.subf %42, %44 : vector<2x1x8xf32>
    %46 = math.exp %45 : vector<2x1x8xf32>
    %47 = arith.subf %43, %44 : vector<2x1x8xf32>
    %48 = math.exp %47 : vector<2x1x8xf32>
    %49 = arith.addf %46, %48 : vector<2x1x8xf32>
    %50 = math.log %49 : vector<2x1x8xf32>
    %51 = arith.addf %44, %50 : vector<2x1x8xf32>
    %52 = arith.mulf %40, %42 : vector<2x1x8xf32>
    %cst_12 = arith.constant 1.000000e+00 : f32
    %53 = vector.broadcast %cst_12 : f32 to vector<2x1x8xf32>
    %54 = arith.subf %53, %40 : vector<2x1x8xf32>
    %55 = arith.mulf %54, %43 : vector<2x1x8xf32>
    %56 = arith.addf %52, %55 : vector<2x1x8xf32>
    %cst_13 = arith.constant 1.000000e+00 : f32
    %57 = vector.broadcast %cst_13 : f32 to vector<2x1x8xf32>
    %58 = arith.mulf %40, %57 : vector<2x1x8xf32>
    %cst_14 = arith.constant 1.000000e+00 : f32
    %59 = vector.broadcast %cst_14 : f32 to vector<2x1x8xf32>
    %60 = arith.subf %59, %40 : vector<2x1x8xf32>
    %cst_15 = arith.constant 1.000000e-01 : f32
    %61 = vector.broadcast %cst_15 : f32 to vector<2x1x8xf32>
    %62 = arith.mulf %60, %61 : vector<2x1x8xf32>
    %63 = arith.addf %58, %62 : vector<2x1x8xf32>
    %64 = arith.subf %51, %56 : vector<2x1x8xf32>
    %65 = arith.mulf %63, %64 : vector<2x1x8xf32>
    %66 = vector.shape_cast %65 : vector<2x1x8xf32> to vector<1x2x1x8xf32>
    %cst_16 = arith.constant dense<0.000000e+00> : vector<1xf32>
    %67 = vector.multi_reduction <add>, %66, %cst_16 [1, 2, 3] : vector<1x2x1x8xf32> to vector<1xf32>
    %68 = vector.shape_cast %67 : vector<1xf32> to vector<1x1x1x1xf32>
    %69 = vector.extract %68[0, 0, 0, 0] : f32 from vector<1x1x1x1xf32>
    %cst_17 = arith.constant 1.600000e+01 : f32
    %70 = arith.divf %69, %cst_17 : f32
    %71 = arith.cmpf oge, %42, %43 : vector<2x1x8xf32>
    %72 = arith.extui %71 : vector<2x1x8xi1> to vector<2x1x8xi32>
    %73 = arith.sitofp %72 : vector<2x1x8xi32> to vector<2x1x8xf32>
    %74 = arith.mulf %40, %73 : vector<2x1x8xf32>
    %75 = vector.shape_cast %74 : vector<2x1x8xf32> to vector<1x2x1x8xf32>
    %cst_18 = arith.constant dense<0.000000e+00> : vector<1xf32>
    %76 = vector.multi_reduction <add>, %75, %cst_18 [1, 2, 3] : vector<1x2x1x8xf32> to vector<1xf32>
    %77 = vector.shape_cast %76 : vector<1xf32> to vector<1x1x1x1xf32>
    %78 = vector.extract %77[0, 0, 0, 0] : f32 from vector<1x1x1x1xf32>
    %cst_19 = arith.constant 1.000000e+02 : f32
    %79 = arith.mulf %cst_19, %78 : f32
    %cst_20 = arith.constant 4.000000e+00 : f32
    %80 = arith.divf %79, %cst_20 : f32
    %cst_21 = arith.constant 1.000000e+02 : f32
    %81 = arith.subf %cst_21, %80 : f32
    %c0_i32 = arith.constant 0 : i32
    %82 = vector.broadcast %c0_i32 : i32 to vector<1x128xi32>
    %83 = arith.cmpi eq, %0, %82 : vector<1x128xi32>
    %cst_22 = arith.constant 0.000000e+00 : f32
    %84 = vector.broadcast %70 : f32 to vector<1x128xf32>
    %85 = vector.broadcast %cst_22 : f32 to vector<1x128xf32>
    %86 = arith.select %83, %84, %85 : vector<1x128xi1>, vector<1x128xf32>
    %87 = arith.addf %1, %86 : vector<1x128xf32>
    %c1_i32 = arith.constant 1 : i32
    %88 = vector.broadcast %c1_i32 : i32 to vector<1x128xi32>
    %89 = arith.cmpi eq, %0, %88 : vector<1x128xi32>
    %cst_23 = arith.constant 0.000000e+00 : f32
    %90 = vector.broadcast %81 : f32 to vector<1x128xf32>
    %91 = vector.broadcast %cst_23 : f32 to vector<1x128xf32>
    %92 = arith.select %89, %90, %91 : vector<1x128xi1>, vector<1x128xf32>
    %93 = arith.addf %87, %92 : vector<1x128xf32>
    %c0_24 = arith.constant 0 : index
    %c0_25 = arith.constant 0 : index
    %94 = vector.load %arg3[%c0_24, %c0_25] : memref<2x4xf32, #tpu.memory_space<vmem>>, vector<2x4xf32>
    %c0_26 = arith.constant 0 : index
    %c0_27 = arith.constant 0 : index
    %95 = vector.load %arg4[%c0_26, %c0_27] : memref<2x4xf32, #tpu.memory_space<vmem>>, vector<2x4xf32>
    %96 = vector.extract_strided_slice %94 {offsets = [0, 0], sizes = [1, 4], strides = [1, 1]} : vector<2x4xf32> to vector<1x4xf32>
    %97 = vector.extract_strided_slice %94 {offsets = [1, 0], sizes = [1, 4], strides = [1, 1]} : vector<2x4xf32> to vector<1x4xf32>
    %98 = vector.extract_strided_slice %95 {offsets = [0, 0], sizes = [1, 4], strides = [1, 1]} : vector<2x4xf32> to vector<1x4xf32>
    %99 = vector.extract_strided_slice %95 {offsets = [1, 0], sizes = [1, 4], strides = [1, 1]} : vector<2x4xf32> to vector<1x4xf32>
    %100 = arith.subf %94, %95 : vector<2x4xf32>
    %101 = math.absf %100 : vector<2x4xf32>
    %102 = vector.shape_cast %101 : vector<2x4xf32> to vector<1x2x4xf32>
    %cst_28 = arith.constant dense<0.000000e+00> : vector<1xf32>
    %103 = vector.multi_reduction <add>, %102, %cst_28 [1, 2] : vector<1x2x4xf32> to vector<1xf32>
    %104 = vector.shape_cast %103 : vector<1xf32> to vector<1x1x1xf32>
    %105 = vector.extract %104[0, 0, 0] : f32 from vector<1x1x1xf32>
    %cst_29 = arith.constant 8.000000e+00 : f32
    %106 = arith.divf %105, %cst_29 : f32
    %cst_30 = arith.constant 5.000000e-01 : f32
    %107 = vector.broadcast %cst_30 : f32 to vector<1x4xf32>
    %108 = arith.mulf %107, %97 : vector<1x4xf32>
    %109 = arith.subf %96, %108 : vector<1x4xf32>
    %cst_31 = arith.constant 5.000000e-01 : f32
    %110 = vector.broadcast %cst_31 : f32 to vector<1x4xf32>
    %111 = arith.mulf %110, %97 : vector<1x4xf32>
    %112 = arith.addf %96, %111 : vector<1x4xf32>
    %cst_32 = arith.constant 5.000000e-01 : f32
    %113 = vector.broadcast %cst_32 : f32 to vector<1x4xf32>
    %114 = arith.mulf %113, %99 : vector<1x4xf32>
    %115 = arith.subf %98, %114 : vector<1x4xf32>
    %cst_33 = arith.constant 5.000000e-01 : f32
    %116 = vector.broadcast %cst_33 : f32 to vector<1x4xf32>
    %117 = arith.mulf %116, %99 : vector<1x4xf32>
    %118 = arith.addf %98, %117 : vector<1x4xf32>
    %119 = arith.minimumf %112, %118 : vector<1x4xf32>
    %120 = arith.maximumf %109, %115 : vector<1x4xf32>
    %121 = arith.subf %119, %120 : vector<1x4xf32>
    %cst_34 = arith.constant 0.000000e+00 : f32
    %122 = vector.broadcast %cst_34 : f32 to vector<1x4xf32>
    %123 = arith.maximumf %121, %122 : vector<1x4xf32>
    %124 = arith.subf %112, %109 : vector<1x4xf32>
    %125 = arith.subf %118, %115 : vector<1x4xf32>
    %126 = arith.addf %124, %125 : vector<1x4xf32>
    %127 = arith.subf %126, %123 : vector<1x4xf32>
    %128 = arith.divf %123, %127 : vector<1x4xf32>
    %129 = arith.maximumf %112, %118 : vector<1x4xf32>
    %130 = arith.minimumf %109, %115 : vector<1x4xf32>
    %131 = arith.subf %129, %130 : vector<1x4xf32>
    %cst_35 = arith.constant 0.000000e+00 : f32
    %132 = vector.broadcast %cst_35 : f32 to vector<1x4xf32>
    %133 = arith.maximumf %131, %132 : vector<1x4xf32>
    %134 = arith.subf %133, %127 : vector<1x4xf32>
    %135 = arith.divf %134, %133 : vector<1x4xf32>
    %136 = arith.subf %128, %135 : vector<1x4xf32>
    %cst_36 = arith.constant 1.000000e+00 : f32
    %137 = vector.broadcast %cst_36 : f32 to vector<1x4xf32>
    %138 = arith.subf %137, %136 : vector<1x4xf32>
    %139 = vector.shape_cast %138 : vector<1x4xf32> to vector<1x1x4xf32>
    %cst_37 = arith.constant dense<0.000000e+00> : vector<1xf32>
    %140 = vector.multi_reduction <add>, %139, %cst_37 [1, 2] : vector<1x1x4xf32> to vector<1xf32>
    %141 = vector.shape_cast %140 : vector<1xf32> to vector<1x1x1xf32>
    %142 = vector.extract %141[0, 0, 0] : f32 from vector<1x1x1xf32>
    %cst_38 = arith.constant 4.000000e+00 : f32
    %143 = arith.divf %142, %cst_38 : f32
    %c2_i32 = arith.constant 2 : i32
    %144 = vector.broadcast %c2_i32 : i32 to vector<1x128xi32>
    %145 = arith.cmpi eq, %0, %144 : vector<1x128xi32>
    %cst_39 = arith.constant 0.000000e+00 : f32
    %146 = vector.broadcast %106 : f32 to vector<1x128xf32>
    %147 = vector.broadcast %cst_39 : f32 to vector<1x128xf32>
    %148 = arith.select %145, %146, %147 : vector<1x128xi1>, vector<1x128xf32>
    %149 = arith.addf %93, %148 : vector<1x128xf32>
    %c3_i32 = arith.constant 3 : i32
    %150 = vector.broadcast %c3_i32 : i32 to vector<1x128xi32>
    %151 = arith.cmpi eq, %0, %150 : vector<1x128xi32>
    %cst_40 = arith.constant 0.000000e+00 : f32
    %152 = vector.broadcast %143 : f32 to vector<1x128xf32>
    %153 = vector.broadcast %cst_40 : f32 to vector<1x128xf32>
    %154 = arith.select %151, %152, %153 : vector<1x128xi1>, vector<1x128xf32>
    %155 = arith.addf %149, %154 : vector<1x128xf32>
    %c0_41 = arith.constant 0 : index
    %c0_42 = arith.constant 0 : index
    %156 = vector.load %arg7[%c0_41, %c0_42] : memref<2x16xf32, #tpu.memory_space<vmem>>, vector<2x16xf32>
    %c0_43 = arith.constant 0 : index
    %c0_44 = arith.constant 0 : index
    %157 = vector.load %arg8[%c0_43, %c0_44] : memref<2x2xi32, #tpu.memory_space<vmem>>, vector<2x2xi32>
    %c0_45 = arith.constant 0 : index
    %c0_46 = arith.constant 0 : index
    %158 = vector.load %arg9[%c0_45, %c0_46] : memref<2x2xi32, #tpu.memory_space<vmem>>, vector<2x2xi32>
    %159 = tpu.iota {dimensions = array<i32: 1>} : vector<2x16xi32>
    %160 = vector.extract_strided_slice %157 {offsets = [0, 0], sizes = [2, 1], strides = [1, 1]} : vector<2x2xi32> to vector<2x1xi32>
    %161 = vector.broadcast %160 : vector<2x1xi32> to vector<2x16xi32>
    %162 = arith.cmpi eq, %159, %161 : vector<2x16xi32>
    %cst_47 = arith.constant 0.000000e+00 : f32
    %163 = vector.broadcast %cst_47 : f32 to vector<2x16xf32>
    %164 = arith.select %162, %156, %163 : vector<2x16xi1>, vector<2x16xf32>
    %cst_48 = arith.constant dense<0.000000e+00> : vector<2xf32>
    %165 = vector.multi_reduction <add>, %164, %cst_48 [1] : vector<2x16xf32> to vector<2xf32>
    %166 = vector.shape_cast %165 : vector<2xf32> to vector<2x1xf32>
    %167 = vector.extract_strided_slice %158 {offsets = [0, 0], sizes = [2, 1], strides = [1, 1]} : vector<2x2xi32> to vector<2x1xi32>
    %168 = vector.broadcast %167 : vector<2x1xi32> to vector<2x16xi32>
    %169 = arith.cmpi eq, %159, %168 : vector<2x16xi32>
    %cst_49 = arith.constant 0.000000e+00 : f32
    %170 = vector.broadcast %cst_49 : f32 to vector<2x16xf32>
    %171 = arith.select %169, %156, %170 : vector<2x16xi1>, vector<2x16xf32>
    %cst_50 = arith.constant dense<0.000000e+00> : vector<2xf32>
    %172 = vector.multi_reduction <add>, %171, %cst_50 [1] : vector<2x16xf32> to vector<2xf32>
    %173 = vector.shape_cast %172 : vector<2xf32> to vector<2x1xf32>
    %cst_51 = arith.constant 1.000000e+00 : f32
    %174 = vector.broadcast %cst_51 : f32 to vector<2x1xf32>
    %175 = arith.addf %174, %173 : vector<2x1xf32>
    %176 = arith.subf %175, %166 : vector<2x1xf32>
    %cst_52 = arith.constant 0.000000e+00 : f32
    %177 = vector.broadcast %cst_52 : f32 to vector<2x1xf32>
    %178 = arith.maximumf %176, %177 : vector<2x1xf32>
    %179 = vector.shape_cast %178 : vector<2x1xf32> to vector<1x2x1xf32>
    %cst_53 = arith.constant dense<0.000000e+00> : vector<1xf32>
    %180 = vector.multi_reduction <add>, %179, %cst_53 [1, 2] : vector<1x2x1xf32> to vector<1xf32>
    %181 = vector.shape_cast %180 : vector<1xf32> to vector<1x1x1xf32>
    %182 = vector.extract %181[0, 0, 0] : f32 from vector<1x1x1xf32>
    %cst_54 = arith.constant 0.000000e+00 : f32
    %183 = arith.addf %cst_54, %182 : f32
    %184 = vector.extract_strided_slice %157 {offsets = [0, 1], sizes = [2, 1], strides = [1, 1]} : vector<2x2xi32> to vector<2x1xi32>
    %185 = vector.broadcast %184 : vector<2x1xi32> to vector<2x16xi32>
    %186 = arith.cmpi eq, %159, %185 : vector<2x16xi32>
    %cst_55 = arith.constant 0.000000e+00 : f32
    %187 = vector.broadcast %cst_55 : f32 to vector<2x16xf32>
    %188 = arith.select %186, %156, %187 : vector<2x16xi1>, vector<2x16xf32>
    %cst_56 = arith.constant dense<0.000000e+00> : vector<2xf32>
    %189 = vector.multi_reduction <add>, %188, %cst_56 [1] : vector<2x16xf32> to vector<2xf32>
    %190 = vector.shape_cast %189 : vector<2xf32> to vector<2x1xf32>
    %191 = vector.extract_strided_slice %158 {offsets = [0, 1], sizes = [2, 1], strides = [1, 1]} : vector<2x2xi32> to vector<2x1xi32>
    %192 = vector.broadcast %191 : vector<2x1xi32> to vector<2x16xi32>
    %193 = arith.cmpi eq, %159, %192 : vector<2x16xi32>
    %cst_57 = arith.constant 0.000000e+00 : f32
    %194 = vector.broadcast %cst_57 : f32 to vector<2x16xf32>
    %195 = arith.select %193, %156, %194 : vector<2x16xi1>, vector<2x16xf32>
    %cst_58 = arith.constant dense<0.000000e+00> : vector<2xf32>
    %196 = vector.multi_reduction <add>, %195, %cst_58 [1] : vector<2x16xf32> to vector<2xf32>
    %197 = vector.shape_cast %196 : vector<2xf32> to vector<2x1xf32>
    %cst_59 = arith.constant 1.000000e+00 : f32
    %198 = vector.broadcast %cst_59 : f32 to vector<2x1xf32>
    %199 = arith.addf %198, %197 : vector<2x1xf32>
    %200 = arith.subf %199, %190 : vector<2x1xf32>
    %cst_60 = arith.constant 0.000000e+00 : f32
    %201 = vector.broadcast %cst_60 : f32 to vector<2x1xf32>
    %202 = arith.maximumf %200, %201 : vector<2x1xf32>
    %203 = vector.shape_cast %202 : vector<2x1xf32> to vector<1x2x1xf32>
    %cst_61 = arith.constant dense<0.000000e+00> : vector<1xf32>
    %204 = vector.multi_reduction <add>, %203, %cst_61 [1, 2] : vector<1x2x1xf32> to vector<1xf32>
    %205 = vector.shape_cast %204 : vector<1xf32> to vector<1x1x1xf32>
    %206 = vector.extract %205[0, 0, 0] : f32 from vector<1x1x1xf32>
    %207 = arith.addf %183, %206 : f32
    %cst_62 = arith.constant 4.000000e+00 : f32
    %208 = arith.divf %207, %cst_62 : f32
    %cst_63 = arith.constant 2.000000e+00 : f32
    %209 = arith.mulf %208, %cst_63 : f32
    %c4_i32 = arith.constant 4 : i32
    %210 = vector.broadcast %c4_i32 : i32 to vector<1x128xi32>
    %211 = arith.cmpi eq, %0, %210 : vector<1x128xi32>
    %cst_64 = arith.constant 0.000000e+00 : f32
    %212 = vector.broadcast %209 : f32 to vector<1x128xf32>
    %213 = vector.broadcast %cst_64 : f32 to vector<1x128xf32>
    %214 = arith.select %211, %212, %213 : vector<1x128xi1>, vector<1x128xf32>
    %215 = arith.addf %155, %214 : vector<1x128xf32>
    %c0_65 = arith.constant 0 : index
    %c0_66 = arith.constant 0 : index
    %c0_67 = arith.constant 0 : index
    %216 = vector.load %arg5[%c0_65, %c0_66, %c0_67] : memref<2x32x8xf32, #tpu.memory_space<vmem>>, vector<2x32x8xf32>
    %c0_68 = arith.constant 0 : index
    %c0_69 = arith.constant 0 : index
    %c0_70 = arith.constant 0 : index
    %217 = vector.load %arg6[%c0_68, %c0_69, %c0_70] : memref<2x32x8xf32, #tpu.memory_space<vmem>>, vector<2x32x8xf32>
    %cst_71 = arith.constant dense<0.000000e+00> : vector<2x32xf32>
    %218 = vector.multi_reduction <add>, %217, %cst_71 [2] : vector<2x32x8xf32> to vector<2x32xf32>
    %219 = vector.shape_cast %218 : vector<2x32xf32> to vector<2x32x1xf32>
    %220 = vector.broadcast %219 : vector<2x32x1xf32> to vector<2x32x8xf32>
    %221 = arith.mulf %216, %220 : vector<2x32x8xf32>
    %cst_72 = arith.constant dense<0.000000e+00> : vector<2x8xf32>
    %222 = vector.multi_reduction <add>, %221, %cst_72 [1] : vector<2x32x8xf32> to vector<2x8xf32>
    %223 = vector.shape_cast %222 : vector<2x8xf32> to vector<2x1x8xf32>
    %cst_73 = arith.constant 7.000000e-02 : f32
    %224 = vector.broadcast %cst_73 : f32 to vector<2x1x8xf32>
    %225 = arith.divf %223, %224 : vector<2x1x8xf32>
    %226 = arith.mulf %225, %40 : vector<2x1x8xf32>
    %cst_74 = arith.constant dense<0.000000e+00> : vector<2x1xf32>
    %227 = vector.multi_reduction <add>, %226, %cst_74 [2] : vector<2x1x8xf32> to vector<2x1xf32>
    %228 = vector.shape_cast %227 : vector<2x1xf32> to vector<2x1x1xf32>
    %cst_75 = arith.constant dense<0.000000e+00> : vector<2x1xf32>
    %229 = vector.multi_reduction <add>, %40, %cst_75 [2] : vector<2x1x8xf32> to vector<2x1xf32>
    %230 = vector.shape_cast %229 : vector<2x1xf32> to vector<2x1x1xf32>
    %cst_76 = arith.constant dense<0xFF800000> : vector<2x1xf32>
    %231 = vector.multi_reduction <maximumf>, %225, %cst_76 [2] : vector<2x1x8xf32> to vector<2x1xf32>
    %232 = vector.shape_cast %231 : vector<2x1xf32> to vector<2x1x1xf32>
    %233 = vector.broadcast %232 : vector<2x1x1xf32> to vector<2x1x8xf32>
    %234 = arith.subf %225, %233 : vector<2x1x8xf32>
    %235 = math.exp %234 : vector<2x1x8xf32>
    %cst_77 = arith.constant dense<0.000000e+00> : vector<2x1xf32>
    %236 = vector.multi_reduction <add>, %235, %cst_77 [2] : vector<2x1x8xf32> to vector<2x1xf32>
    %237 = vector.shape_cast %236 : vector<2x1xf32> to vector<2x1x1xf32>
    %238 = math.log %237 : vector<2x1x1xf32>
    %239 = arith.addf %232, %238 : vector<2x1x1xf32>
    %240 = arith.divf %228, %230 : vector<2x1x1xf32>
    %241 = arith.subf %239, %240 : vector<2x1x1xf32>
    %242 = vector.shape_cast %241 : vector<2x1x1xf32> to vector<1x2x1x1xf32>
    %cst_78 = arith.constant dense<0.000000e+00> : vector<1xf32>
    %243 = vector.multi_reduction <add>, %242, %cst_78 [1, 2, 3] : vector<1x2x1x1xf32> to vector<1xf32>
    %244 = vector.shape_cast %243 : vector<1xf32> to vector<1x1x1x1xf32>
    %245 = vector.extract %244[0, 0, 0, 0] : f32 from vector<1x1x1x1xf32>
    %cst_79 = arith.constant 2.000000e+00 : f32
    %246 = arith.divf %245, %cst_79 : f32
    %c5_i32 = arith.constant 5 : i32
    %247 = vector.broadcast %c5_i32 : i32 to vector<1x128xi32>
    %248 = arith.cmpi eq, %0, %247 : vector<1x128xi32>
    %cst_80 = arith.constant 0.000000e+00 : f32
    %249 = vector.broadcast %246 : f32 to vector<1x128xf32>
    %250 = vector.broadcast %cst_80 : f32 to vector<1x128xf32>
    %251 = arith.select %248, %249, %250 : vector<1x128xi1>, vector<1x128xf32>
    %252 = arith.addf %215, %251 : vector<1x128xf32>
    %c0_81 = arith.constant 0 : index
    %c0_82 = arith.constant 0 : index
    %253 = vector.load %arg10[%c0_81, %c0_82] : memref<1x128xf32, #tpu.memory_space<vmem>>, vector<1x128xf32>
    tpu.vector_store %arg10[%c0_81, %c0_82], %252 {strides = array<i32>} : memref<1x128xf32, #tpu.memory_space<vmem>>, vector<1x128xf32>,
    return
  }
}

</mosaic_0001>

<llo_original>
// kernel: tpu_custom_call.1
$region0: #{tpu_custom_call.1}
  #allocation0 [shape = 'u32[]', space=smem, size = 0x4, offset = 0x4, fixed_abs, tag = 'smem constant byte address 0x4 - core index']
  #allocation1 [shape = 'u32[144,128]{1,0:T(1,128)}', space=vmem, size = 0x12000, scoped, tag = 'internal scratch']
  %s0 = inlined_call_operand.vmem [shape: s32[4], index: 0, kind: input, shape index: {}]
  %s1 = inlined_call_operand.vmem [shape: s32[4], index: 1, kind: input, shape index: {}]
  %s2 = inlined_call_operand.vmem [shape: f32[2,2,8], index: 2, kind: input, shape index: {}]
  %s3 = inlined_call_operand.vmem [shape: f32[2,4], index: 3, kind: input, shape index: {}]
  %s4 = inlined_call_operand.vmem [shape: f32[2,4], index: 4, kind: input, shape index: {}]
  %s5 = inlined_call_operand.vmem [shape: f32[2,32,8], index: 5, kind: input, shape index: {}]
  %s6 = inlined_call_operand.vmem [shape: f32[2,32,8], index: 6, kind: input, shape index: {}]
  %s7 = inlined_call_operand.vmem [shape: f32[2,16], index: 7, kind: input, shape index: {}]
  %s8 = inlined_call_operand.vmem [shape: s32[2,2], index: 8, kind: input, shape index: {}]
  %s9 = inlined_call_operand.vmem [shape: s32[2,2], index: 9, kind: input, shape index: {}]
  %s10 = inlined_call_operand.hbm [shape: f32[1,128], index: 10, kind: output, shape index: {}]
  %s11 = sld [smem:[#allocation0]]
  $region58: #{tpu_custom_call.1} parent=0
    _
  %s13 = ssub.s32 1, %s11
  %s14 = scalar_select 0, %s13, %s11
  $region1: #{tpu_custom_call.1} parent=0
    #allocation2 [shape = 'u8[512]{0}', space=smem, size = 0x200, scoped, tag = 'input window, operand 0, single buffered']
    #allocation3 [shape = 's32[1]{0}', space=sflag, size = 0x4, scoped, tag = 'scoped memory for tpu_custom_call.1']
    #allocation4 [shape = 's32[1]{0}', space=sflag, size = 0x4, scoped, tag = 'scoped memory for tpu_custom_call.1']
    #allocation5 [shape = 'u8[512]{0}', space=smem, size = 0x200, scoped, tag = 'input window, operand 1, single buffered']
    #allocation6 [shape = 's32[1]{0}', space=sflag, size = 0x4, scoped, tag = 'scoped memory for tpu_custom_call.1']
    #allocation7 [shape = 'u8[512]{0}', space=vmem, size = 0x400, scoped, tag = 'output window, operand 0, single buffered']
    %15 = vsyncpa [#allocation4], 0
    %16 = vsyncpa [#allocation6], 0
    %17 = vsyncpa [#allocation3], 0
    // Predicated region
    $region2: #{tpu_custom_call.1} parent=1 // pred_check
      _
    $region3: #{tpu_custom_call.1} parent=1 // pred_check_branch
      %19 = sbr.rel (0) target = $region5
    $region4: #{tpu_custom_call.1} parent=1 // pred_region
      %s21 = ssub.s32 16, 16
      %22 = vsyncadd [#allocation4], %s21
      %s24 = sshll.u32 %s0, 4
      %s25 = int_to_ptr.vmem [resolvable:$true] %s24
      %27 = dma.vmem_to_smem %s25, 16, [#allocation2], [#allocation4]
    $region5: #{tpu_custom_call.1} parent=1 // pred_fallthru
      _
    // Predicated region
    $region6: #{tpu_custom_call.1} parent=1 // pred_check
      _
    $region7: #{tpu_custom_call.1} parent=1 // pred_check_branch
      %29 = sbr.rel (0) target = $region9
    $region8: #{tpu_custom_call.1} parent=1 // pred_region
      %s31 = ssub.s32 16, 16
      %32 = vsyncadd [#allocation6], %s31
      %s34 = sshll.u32 %s1, 4
      %s35 = int_to_ptr.vmem [resolvable:$true] %s34
      %37 = dma.vmem_to_smem %s35, 16, [#allocation5], [#allocation6]
    $region9: #{tpu_custom_call.1} parent=1 // pred_fallthru
      _
    // Predicated region
    $region10: #{tpu_custom_call.1} parent=1 // pred_check
      _
    $region11: #{tpu_custom_call.1} parent=1 // pred_check_branch
      %39 = sbr.rel (0) target = $region13
    $region12: #{tpu_custom_call.1} parent=1 // pred_region
      _
    $region13: #{tpu_custom_call.1} parent=1 // pred_fallthru
      _
    // Predicated region
    $region14: #{tpu_custom_call.1} parent=1 // pred_check
      _
    $region15: #{tpu_custom_call.1} parent=1 // pred_check_branch
      %41 = sbr.rel (0) target = $region17
    $region16: #{tpu_custom_call.1} parent=1 // pred_region
      _
    $region17: #{tpu_custom_call.1} parent=1 // pred_fallthru
      _
    // Predicated region
    $region18: #{tpu_custom_call.1} parent=1 // pred_check
      _
    $region19: #{tpu_custom_call.1} parent=1 // pred_check_branch
      %43 = sbr.rel (0) target = $region21
    $region20: #{tpu_custom_call.1} parent=1 // pred_region
      _
    $region21: #{tpu_custom_call.1} parent=1 // pred_fallthru
      _
    // Predicated region
    $region22: #{tpu_custom_call.1} parent=1 // pred_check
      _
    $region23: #{tpu_custom_call.1} parent=1 // pred_check_branch
      %45 = sbr.rel (0) target = $region25
    $region24: #{tpu_custom_call.1} parent=1 // pred_region
      _
    $region25: #{tpu_custom_call.1} parent=1 // pred_fallthru
      _
    // Predicated region
    $region26: #{tpu_custom_call.1} parent=1 // pred_check
      _
    $region27: #{tpu_custom_call.1} parent=1 // pred_check_branch
      %47 = sbr.rel (0) target = $region29
    $region28: #{tpu_custom_call.1} parent=1 // pred_region
      _
    $region29: #{tpu_custom_call.1} parent=1 // pred_fallthru
      _
    // Predicated region
    $region30: #{tpu_custom_call.1} parent=1 // pred_check
      _
    $region31: #{tpu_custom_call.1} parent=1 // pred_check_branch
      %49 = sbr.rel (0) target = $region33
    $region32: #{tpu_custom_call.1} parent=1 // pred_region
      _
    $region33: #{tpu_custom_call.1} parent=1 // pred_fallthru
      _
    // Predicated region
    $region34: #{tpu_custom_call.1} parent=1 // pred_check
      _
    $region35: #{tpu_custom_call.1} parent=1 // pred_check_branch
      %51 = sbr.rel (0) target = $region37
    $region36: #{tpu_custom_call.1} parent=1 // pred_region
      _
    $region37: #{tpu_custom_call.1} parent=1 // pred_fallthru
      _
    // Predicated region
    $region38: #{tpu_custom_call.1} parent=1 // pred_check
      _
    $region39: #{tpu_custom_call.1} parent=1 // pred_check_branch
      %53 = sbr.rel (0) target = $region41
    $region40: #{tpu_custom_call.1} parent=1 // pred_region
      _
    $region41: #{tpu_custom_call.1} parent=1 // pred_fallthru
      _
    // Predicated region
    $region42: #{tpu_custom_call.1} parent=1 // pred_check
      _
    $region43: #{tpu_custom_call.1} parent=1 // pred_check_branch
      %55 = sbr.rel (0) target = $region45
    $region44: #{tpu_custom_call.1} parent=1 // pred_region
      %56 = dma.done [#allocation4], 16
    $region45: #{tpu_custom_call.1} parent=1 // pred_fallthru
      _
    // Predicated region
    $region46: #{tpu_custom_call.1} parent=1 // pred_check
      _
    $region47: #{tpu_custom_call.1} parent=1 // pred_check_branch
      %58 = sbr.rel (0) target = $region49
    $region48: #{tpu_custom_call.1} parent=1 // pred_region
      %59 = dma.done [#allocation6], 16
    $region49: #{tpu_custom_call.1} parent=1 // pred_fallthru
      _
    %60 = sfence
    %v61 = vlaneseq
    %v62 = vand.u32 %v61, 127
    %s63 = sld [smem:[#allocation2]]
    %v64 = vstv %s63
    %vm65 = vcmp.eq.s32.totalorder %v64, 0
    %vm66 = vcmp.eq.s32.totalorder %v64, 1
    %s67 = sld [smem:[#allocation5]]
    %v68 = vstv %s67
    %vm69 = vcmp.eq.s32.totalorder %v62, %v68
    %vm70 = vmand %vm65, %vm69
    %vm71 = vmand %vm66, %vm69
    %v72 = vsel %vm70, 1.0, 0.0
    %v73 = vsel %vm71, 1.0, 0.0
    %s74 = sld [smem:[#allocation2 + $0x1]]
    %v75 = vstv %s74
    %vm76 = vcmp.eq.s32.totalorder %v75, 0
    %vm77 = vcmp.eq.s32.totalorder %v75, 1
    %s78 = sld [smem:[#allocation5 + $0x1]]
    %v79 = vstv %s78
    %vm80 = vcmp.eq.s32.totalorder %v62, %v79
    %vm81 = vmand %vm76, %vm80
    %vm82 = vmand %vm77, %vm80
    %v83 = vsel %vm81, 1.0, %v72
    %v84 = vsel %vm82, 1.0, %v73
    %s85 = sld [smem:[#allocation2 + $0x2]]
    %v86 = vstv %s85
    %vm87 = vcmp.eq.s32.totalorder %v86, 0
    %vm88 = vcmp.eq.s32.totalorder %v86, 1
    %s89 = sld [smem:[#allocation5 + $0x2]]
    %v90 = vstv %s89
    %vm91 = vcmp.eq.s32.totalorder %v62, %v90
    %vm92 = vmand %vm87, %vm91
    %vm93 = vmand %vm88, %vm91
    %v94 = vsel %vm92, 1.0, %v83
    %v95 = vsel %vm93, 1.0, %v84
    %s96 = sld [smem:[#allocation2 + $0x3]]
    %v97 = vstv %s96
    %vm98 = vcmp.eq.s32.totalorder %v97, 0
    %vm99 = vcmp.eq.s32.totalorder %v97, 1
    %s100 = sld [smem:[#allocation5 + $0x3]]
    %v101 = vstv %s100
    %vm102 = vcmp.eq.s32.totalorder %v62, %v101
    %vm103 = vmand %vm98, %vm102
    %vm104 = vmand %vm99, %vm102
    %v105 = vsel %vm103, 1.0, %v94
    %v106 = vsel %vm104, 1.0, %v95
    %v107 = vld [vmem:[%s2] sm:$0x3]
    %v108 = vld [vmem:[%s2 + $0x2] sm:$0x3]
    %v111 = vrot.slane %v107, 1
    %v112 = vrot.slane %v108, 1
    %v115 = vmax.f32 %v107, %v111
    %v116 = vmax.f32 %v108, %v112
    %v117 = vsub.f32 %v107, %v115
    %v118 = vsub.f32 %v108, %v116
    %v119 = vmul.f32 %v117, 1.442695
    %v120 = vpow.pop %v119
    %v121 = vmul.f32 %v118, 1.442695
    %v122 = vpow.pop %v121
    %v125 = vrot.slane %v115, 7
    %v126 = vrot.slane %v116, 7
    %v129 = vsub.f32 %v107, %v125
    %v130 = vsub.f32 %v108, %v126
    %v131 = vmul.f32 %v129, 1.442695
    %v132 = vpow.pop %v131
    %v133 = vmul.f32 %v130, 1.442695
    %v134 = vpow.pop %v133
    %v137 = vrot.slane %v132, 1
    %v138 = vrot.slane %v134, 1
    %v141 = vadd.f32 %v120, %v137
    %v142 = vadd.f32 %v122, %v138
    %v143 = vlog2.pop %v141
    %v144 = vmul.f32 %v143, 0.6931472
    %v145 = vlog2.pop %v142
    %v146 = vmul.f32 %v145, 0.6931472
    %v147 = vadd.f32 %v115, %v144
    %v148 = vadd.f32 %v116, %v146
    %v149 = vmul.f32 %v105, %v107
    %v150 = vmul.f32 %v106, %v108
    %v151 = vsub.f32 1.0, %v105
    %v152 = vsub.f32 1.0, %v106
    %v153 = vmul.f32 %v151, %v107
    %v154 = vmul.f32 %v152, %v108
    %v157 = vrot.slane %v153, 1
    %v158 = vrot.slane %v154, 1
    %v161 = vadd.f32 %v149, %v157
    %v162 = vadd.f32 %v150, %v158
    %v163 = vmul.f32 %v151, 0.1
    %v164 = vmul.f32 %v152, 0.1
    %v165 = vadd.f32 %v105, %v163
    %v166 = vadd.f32 %v106, %v164
    %v167 = vsub.f32 %v147, %v161
    %v168 = vsub.f32 %v148, %v162
    %v169 = vmul.f32 %v165, %v167
    %v170 = vmul.f32 %v166, %v168
    %vm171 = vcmask 57344
    %v172 = vsel %vm171, %v169, 0.0
    %v173 = vsel %vm171, %v170, 0.0
    %v174 = vadd.f32 %v172, %v173
    %175 = vadd.xlane.f32.xlu0 %v174
    %v176 = vpop.xlane.xlu0 %175
    %v177 = vrot.slane %v176, 4
    %v178 = vadd.f32 %v176, %v177
    %v179 = vrot.slane %v178, 2
    %v180 = vadd.f32 %v178, %v179
    %v181 = vrot.slane %v180, 1
    %v182 = vadd.f32 %v180, %v181
    %s183 = vtos %v182
    %v184 = vrcp.pop 16.0
    %s185 = vtos %v184
    %s186 = smul.f32 %s183, %s185
    %vm187 = vcmp.ge.f32.partialorder %v107, %v111
    %vm188 = vcmp.ge.f32.partialorder %v108, %v112
    %v189 = vsel %vm187, 1, 0
    %v190 = vsel %vm188, 1, 0
    %v191 = vcvt.s32.f32 %v189
    %v192 = vcvt.s32.f32 %v190
    %v193 = vmul.f32 %v105, %v191
    %v194 = vmul.f32 %v106, %v192
    %v195 = vsel %vm171, %v193, 0.0
    %v196 = vsel %vm171, %v194, 0.0
    %v197 = vadd.f32 %v195, %v196
    %198 = vadd.xlane.f32.xlu0 %v197
    %v199 = vpop.xlane.xlu0 %198
    %v200 = vrot.slane %v199, 4
    %v201 = vadd.f32 %v199, %v200
    %v202 = vrot.slane %v201, 2
    %v203 = vadd.f32 %v201, %v202
    %v204 = vrot.slane %v203, 1
    %v205 = vadd.f32 %v203, %v204
    %s206 = vtos %v205
    %s207 = smul.f32 %s206, 100.0
    %v208 = vrcp.pop 4.0
    %s209 = vtos %v208
    %s210 = smul.f32 %s207, %s209
    %s211 = ssub.f32 100.0, %s210
    %vm212 = vcmp.eq.s32.totalorder %v62, 0
    %v213 = vstv %s186
    %v214 = vsel %vm212, %v213, 0.0
    %v215 = vadd.f32 %v214, 0.0
    %vm216 = vcmp.eq.s32.totalorder %v62, 1
    %v217 = vstv %s211
    %v218 = vsel %vm216, %v217, 0.0
    %v219 = vadd.f32 %v215, %v218
    %v220 = vld [vmem:[%s3] sm:$0x3]
    %v221 = vld [vmem:[%s4] sm:$0x3]
    %v222 = vsub.f32 %v220, %v221
    %v223 = vand.u32 2147483647, %v222
    %vm224 = vcmask 25600
    %v225 = vsel %vm224, %v223, 0.0
    %226 = vadd.xlane.f32.xlu0 %v225
    %v227 = vpop.xlane.xlu0 %226
    %v228 = vrot.slane %v227, 4
    %v229 = vadd.f32 %v227, %v228
    %v230 = vrot.slane %v229, 2
    %v231 = vadd.f32 %v229, %v230
    %v232 = vrot.slane %v231, 1
    %v233 = vadd.f32 %v231, %v232
    %s234 = vtos %v233
    %v235 = vrcp.pop 8.0
    %s236 = vtos %v235
    %s237 = smul.f32 %s234, %s236
    %v238 = vmul.f32 %v220, 0.5
    %v240 = vrot.slane %v238, 1
    %v242 = vsub.f32 %v220, %v240
    %v243 = vadd.f32 %v220, %v240
    %v244 = vmul.f32 %v221, 0.5
    %v246 = vrot.slane %v244, 1
    %v248 = vsub.f32 %v221, %v246
    %v249 = vadd.f32 %v221, %v246
    %v250 = vmin.f32 %v243, %v249
    %v251 = vmax.f32 %v242, %v248
    %v252 = vsub.f32 %v250, %v251
    %v253 = vmax.f32 %v252, 0.0
    %v254 = vsub.f32 %v243, %v242
    %v255 = vsub.f32 %v249, %v248
    %v256 = vadd.f32 %v254, %v255
    %v257 = vsub.f32 %v256, %v253
    %v258 = vrcp.pop %v257
    %v259 = vmul.f32 %v253, %v258
    %v260 = vmax.f32 %v243, %v249
    %v261 = vmin.f32 %v242, %v248
    %v262 = vsub.f32 %v260, %v261
    %v263 = vmax.f32 %v262, 0.0
    %v264 = vsub.f32 %v263, %v257
    %v265 = vrcp.pop %v263
    %v266 = vmul.f32 %v264, %v265
    %v267 = vsub.f32 %v259, %v266
    %v268 = vsub.f32 1.0, %v267
    %vm269 = vcmask 24576
    %v270 = vsel %vm269, %v268, 0.0
    %271 = vadd.xlane.f32.xlu0 %v270
    %v272 = vpop.xlane.xlu0 %271
    %v273 = vrot.slane %v272, 4
    %v274 = vadd.f32 %v272, %v273
    %v275 = vrot.slane %v274, 2
    %v276 = vadd.f32 %v274, %v275
    %v277 = vrot.slane %v276, 1
    %v278 = vadd.f32 %v276, %v277
    %s279 = vtos %v278
    %v280 = vrcp.pop 4.0
    %s281 = vtos %v280
    %s282 = smul.f32 %s279, %s281
    %vm283 = vcmp.eq.s32.totalorder %v62, 2
    %v284 = vstv %s237
    %v285 = vsel %vm283, %v284, 0.0
    %v286 = vadd.f32 %v219, %v285
    %vm287 = vcmp.eq.s32.totalorder %v62, 3
    %v288 = vstv %s282
    %v289 = vsel %vm287, %v288, 0.0
    %v290 = vadd.f32 %v286, %v289
    %v291 = vld [vmem:[%s7] sm:$0x3]
    %v292 = vld [vmem:[%s8] sm:$0x3]
    %v293 = vld [vmem:[%s9] sm:$0x3]
    %294 = vset.pattern.permute.xlu0 0
    %295 = vperm.xlu0 %294, %v292
    %v296 = vpop.permute.xlu0 %295
    %vm297 = vcmp.eq.s32.totalorder %v62, %v296
    %v298 = vsel %vm297, %v291, 0.0
    %vm299 = vcmask 123904
    %v300 = vsel %vm299, %v298, 0.0
    %301 = vadd.xlane.f32.xlu0 %v300
    %v302 = vpop.xlane.xlu0 %301
    %303 = vset.pattern.permute.xlu0 0
    %304 = vperm.xlu0 %303, %v293
    %v305 = vpop.permute.xlu0 %304
    %vm306 = vcmp.eq.s32.totalorder %v62, %v305
    %v307 = vsel %vm306, %v291, 0.0
    %v308 = vsel %vm299, %v307, 0.0
    %309 = vadd.xlane.f32.xlu0 %v308
    %v310 = vpop.xlane.xlu0 %309
    %v311 = vadd.f32 %v310, 1.0
    %v312 = vsub.f32 %v311, %v302
    %v313 = vmax.f32 %v312, 0.0
    %vm314 = vcmask 1024
    %v315 = vsel %vm314, %v313, 0.0
    %316 = vadd.xlane.f32.xlu0 %v315
    %v317 = vpop.xlane.xlu0 %316
    %v318 = vrot.slane %v317, 4
    %v319 = vadd.f32 %v317, %v318
    %v320 = vrot.slane %v319, 2
    %v321 = vadd.f32 %v319, %v320
    %v322 = vrot.slane %v321, 1
    %v323 = vadd.f32 %v321, %v322
    %s324 = vtos %v323
    %s325 = sadd.f32 %s324, 0.0
    %326 = vset.pattern.permute.xlu0 1
    %327 = vperm.xlu0 %326, %v292
    %v328 = vpop.permute.xlu0 %327
    %vm329 = vcmp.eq.s32.totalorder %v62, %v328
    %v330 = vsel %vm329, %v291, 0.0
    %v331 = vsel %vm299, %v330, 0.0
    %332 = vadd.xlane.f32.xlu0 %v331
    %v333 = vpop.xlane.xlu0 %332
    %334 = vset.pattern.permute.xlu0 1
    %335 = vperm.xlu0 %334, %v293
    %v336 = vpop.permute.xlu0 %335
    %vm337 = vcmp.eq.s32.totalorder %v62, %v336
    %v338 = vsel %vm337, %v291, 0.0
    %v339 = vsel %vm299, %v338, 0.0
    %340 = vadd.xlane.f32.xlu0 %v339
    %v341 = vpop.xlane.xlu0 %340
    %v342 = vadd.f32 %v341, 1.0
    %v343 = vsub.f32 %v342, %v333
    %v344 = vmax.f32 %v343, 0.0
    %v345 = vsel %vm314, %v344, 0.0
    %346 = vadd.xlane.f32.xlu0 %v345
    %v347 = vpop.xlane.xlu0 %346
    %v348 = vrot.slane %v347, 4
    %v349 = vadd.f32 %v347, %v348
    %v350 = vrot.slane %v349, 2
    %v351 = vadd.f32 %v349, %v350
    %v352 = vrot.slane %v351, 1
    %v353 = vadd.f32 %v351, %v352
    %s354 = vtos %v353
    %s355 = sadd.f32 %s325, %s354
    %v356 = vrcp.pop 4.0
    %s357 = vtos %v356
    %s358 = smul.f32 %s355, %s357
    %s359 = smul.f32 %s358, 2.0
    %vm360 = vcmp.eq.s32.totalorder %v62, 4
    %v361 = vstv %s359
    %v362 = vsel %vm360, %v361, 0.0
    %v363 = vadd.f32 %v290, %v362
    %v364 = vld [vmem:[%s5] sm:$0xff]
    %v365 = vld [vmem:[%s5 + $0x8] sm:$0xff]
    %v366 = vld [vmem:[%s5 + $0x10] sm:$0xff]
    %v367 = vld [vmem:[%s5 + $0x18] sm:$0xff]
    %v368 = vld [vmem:[%s5 + $0x20] sm:$0xff]
    %v369 = vld [vmem:[%s5 + $0x28] sm:$0xff]
    %v370 = vld [vmem:[%s5 + $0x30] sm:$0xff]
    %v371 = vld [vmem:[%s5 + $0x38] sm:$0xff]
    %v372 = vld [vmem:[%s6] sm:$0xff]
    %v373 = vld [vmem:[%s6 + $0x8] sm:$0xff]
    %v374 = vld [vmem:[%s6 + $0x10] sm:$0xff]
    %v375 = vld [vmem:[%s6 + $0x18] sm:$0xff]
    %v376 = vld [vmem:[%s6 + $0x20] sm:$0xff]
    %v377 = vld [vmem:[%s6 + $0x28] sm:$0xff]
    %v378 = vld [vmem:[%s6 + $0x30] sm:$0xff]
    %v379 = vld [vmem:[%s6 + $0x38] sm:$0xff]
    %vm380 = vcmask 64512
    %v381 = vsel %vm380, %v372, 0.0
    %382 = vadd.xlane.f32.xlu0 %v381
    %v383 = vpop.xlane.xlu0 %382
    %v384 = vsel %vm380, %v373, 0.0
    %385 = vadd.xlane.f32.xlu0 %v384
    %v386 = vpop.xlane.xlu0 %385
    %v387 = vsel %vm380, %v374, 0.0
    %388 = vadd.xlane.f32.xlu0 %v387
    %v389 = vpop.xlane.xlu0 %388
    %v390 = vsel %vm380, %v375, 0.0
    %391 = vadd.xlane.f32.xlu0 %v390
    %v392 = vpop.xlane.xlu0 %391
    %v393 = vsel %vm380, %v376, 0.0
    %394 = vadd.xlane.f32.xlu0 %v393
    %v395 = vpop.xlane.xlu0 %394
    %v396 = vsel %vm380, %v377, 0.0
    %397 = vadd.xlane.f32.xlu0 %v396
    %v398 = vpop.xlane.xlu0 %397
    %v399 = vsel %vm380, %v378, 0.0
    %400 = vadd.xlane.f32.xlu0 %v399
    %v401 = vpop.xlane.xlu0 %400
    %v402 = vsel %vm380, %v379, 0.0
    %403 = vadd.xlane.f32.xlu0 %v402
    %v404 = vpop.xlane.xlu0 %403
    %v405 = vmul.f32 %v364, %v383
    %v406 = vmul.f32 %v365, %v386
    %v407 = vmul.f32 %v366, %v389
    %v408 = vmul.f32 %v367, %v392
    %v409 = vmul.f32 %v368, %v395
    %v410 = vmul.f32 %v369, %v398
    %v411 = vmul.f32 %v370, %v401
    %v412 = vmul.f32 %v371, %v404
    %v413 = vsel %vm380, %v405, 0.0
    %v414 = vsel %vm380, %v406, 0.0
    %v415 = vadd.f32 %v413, %v414
    %v416 = vsel %vm380, %v407, 0.0
    %v417 = vadd.f32 %v415, %v416
    %v418 = vsel %vm380, %v408, 0.0
    %v419 = vadd.f32 %v417, %v418
    %v420 = vrot.slane %v419, 4
    %v421 = vadd.f32 %v419, %v420
    %v422 = vrot.slane %v421, 2
    %v423 = vadd.f32 %v421, %v422
    %v424 = vrot.slane %v423, 1
    %v425 = vadd.f32 %v423, %v424
    %v426 = vsel %vm380, %v409, 0.0
    %v427 = vsel %vm380, %v410, 0.0
    %v428 = vadd.f32 %v426, %v427
    %v429 = vsel %vm380, %v411, 0.0
    %v430 = vadd.f32 %v428, %v429
    %v431 = vsel %vm380, %v412, 0.0
    %v432 = vadd.f32 %v430, %v431
    %v433 = vrot.slane %v432, 4
    %v434 = vadd.f32 %v432, %v433
    %v435 = vrot.slane %v434, 2
    %v436 = vadd.f32 %v434, %v435
    %v437 = vrot.slane %v436, 1
    %v438 = vadd.f32 %v436, %v437
    %v439 = vrcp.pop 0.07
    %v440 = vmul.f32 %v425, %v439
    %v441 = vmul.f32 %v438, %v439
    %v442 = vmul.f32 %v440, %v105
    %v443 = vmul.f32 %v441, %v106
    %v444 = vsel %vm380, %v442, 0.0
    %445 = vadd.xlane.f32.xlu0 %v444
    %v446 = vpop.xlane.xlu0 %445
    %v447 = vsel %vm380, %v443, 0.0
    %448 = vadd.xlane.f32.xlu0 %v447
    %v449 = vpop.xlane.xlu0 %448
    %v450 = vsel %vm380, %v105, 0.0
    %451 = vadd.xlane.f32.xlu0 %v450
    %v452 = vpop.xlane.xlu0 %451
    %v453 = vsel %vm380, %v106, 0.0
    %454 = vadd.xlane.f32.xlu0 %v453
    %v455 = vpop.xlane.xlu0 %454
    %v456 = vsel %vm380, %v440, -inf
    %457 = vmax.xlane.f32.xlu0 %v456
    %v458 = vpop.xlane.xlu0 %457
    %v459 = vsel %vm380, %v441, -inf
    %460 = vmax.xlane.f32.xlu0 %v459
    %v461 = vpop.xlane.xlu0 %460
    %v462 = vsub.f32 %v440, %v458
    %v463 = vsub.f32 %v441, %v461
    %v464 = vmul.f32 %v462, 1.442695
    %v465 = vpow.pop %v464
    %v466 = vmul.f32 %v463, 1.442695
    %v467 = vpow.pop %v466
    %v468 = vsel %vm380, %v465, 0.0
    %469 = vadd.xlane.f32.xlu0 %v468
    %v470 = vpop.xlane.xlu0 %469
    %v471 = vsel %vm380, %v467, 0.0
    %472 = vadd.xlane.f32.xlu0 %v471
    %v473 = vpop.xlane.xlu0 %472
    %v474 = vlog2.pop %v470
    %v475 = vmul.f32 %v474, 0.6931472
    %v476 = vlog2.pop %v473
    %v477 = vmul.f32 %v476, 0.6931472
    %v478 = vadd.f32 %v458, %v475
    %v479 = vadd.f32 %v461, %v477
    %v480 = vrcp.pop %v452
    %v481 = vmul.f32 %v446, %v480
    %v482 = vrcp.pop %v455
    %v483 = vmul.f32 %v449, %v482
    %v484 = vsub.f32 %v478, %v481
    %v485 = vsub.f32 %v479, %v483
    %vm486 = vcmask 0
    %v487 = vsel %vm486, %v484, 0.0
    %v488 = vsel %vm486, %v485, 0.0
    %v489 = vadd.f32 %v487, %v488
    %490 = vadd.xlane.f32.xlu0 %v489
    %v491 = vpop.xlane.xlu0 %490
    %v492 = vrot.slane %v491, 4
    %v493 = vadd.f32 %v491, %v492
    %v494 = vrot.slane %v493, 2
    %v495 = vadd.f32 %v493, %v494
    %v496 = vrot.slane %v495, 1
    %v497 = vadd.f32 %v495, %v496
    %s498 = vtos %v497
    %v499 = vrcp.pop 2.0
    %s500 = vtos %v499
    %s501 = smul.f32 %s498, %s500
    %vm502 = vcmp.eq.s32.totalorder %v62, 5
    %v503 = vstv %s501
    %v504 = vsel %vm502, %v503, 0.0
    %v505 = vadd.f32 %v363, %v504
    %506 = vst [vmem:[#allocation7] sm:$0x1] %v505
    // Predicated region
    $region50: #{tpu_custom_call.1} parent=1 // pred_check
      _
    $region51: #{tpu_custom_call.1} parent=1 // pred_check_branch
      %508 = sbr.rel (0) target = $region53
    $region52: #{tpu_custom_call.1} parent=1 // pred_region
      %s510 = ssub.s32 16, 16
      %511 = vsyncadd [#allocation3], %s510
      %s513 = sshll.u32 [#allocation7], 4
      %s514 = int_to_ptr.vmem [resolvable:$true] %s513
      %516 = dma.vmem_to_hbm [thread:$0]  %s514, 16, %s10, [#allocation3]
    $region53: #{tpu_custom_call.1} parent=1 // pred_fallthru
      _
    // Predicated region
    $region54: #{tpu_custom_call.1} parent=1 // pred_check
      _
    $region55: #{tpu_custom_call.1} parent=1 // pred_check_branch
      %518 = sbr.rel (0) target = $region57
    $region56: #{tpu_custom_call.1} parent=1 // pred_region
      %519 = dma.done [#allocation3], 16
    $region57: #{tpu_custom_call.1} parent=1 // pred_fallthru
      _
    %520 = vsyncpa [#allocation3], 1
    %521 = vsyncpa [#allocation4], 1
    %522 = vsyncpa [#allocation6], 1

</llo_original>
